<compile_context>
chip_gen: v7x
topology: tpu7x:2x2x1
jax: 0.10.0
libtpu: 0.0.40
codegen_flags: <defaults>
</compile_context>

<pallas_src>
import jax
import jax.numpy as jnp
from jax.experimental import pallas as pl
from jax.experimental.pallas import tpu as pltpu

_EPS = 1e-7
_LANE = 128
_TARGET_BUFFER_BYTES = 1 << 20  # ~1 MiB per (C, TILE) pipeline buffer


def _pick_tile(C, HW):
    """Largest lane tile (multiple of 128) with <= ~1 MiB per (C, TILE) buffer."""
    c_pad = ((C + 7) // 8) * 8                       # sublane padding in VMEM
    cap = (_TARGET_BUFFER_BYTES // (c_pad * 4)) // _LANE * _LANE
    cap = max(cap, 2 * _LANE)
    hw_pad = ((HW + _LANE - 1) // _LANE) * _LANE
    return min(cap, hw_pad)


def _make_ce_sums_kernel(hw, tile, need_mask):
    def kernel(pred_ref, tgt_ref, s_ref, t_ref):
        # pred_ref / tgt_ref: (C, TILE) input tiles.
        # s_ref / t_ref: (C, TILE) accumulators, resident in VMEM across the
        # whole pixel-tile (reduction) axis — same output block index every step.
        @pl.when(pl.program_id(1) == 0)
        def _():
            s_ref[...] = jnp.zeros_like(s_ref)
            t_ref[...] = jnp.zeros_like(t_ref)

        p = pred_ref[...].astype(jnp.float32)        # (C, TILE)
        t = tgt_ref[...].astype(jnp.float32)
        if need_mask:
            # Ragged tail: mask out-of-range pixels instead of padding in HBM.
            lane = jax.lax.broadcasted_iota(jnp.int32, p.shape, 1)
            valid = (pl.program_id(1) * tile + lane) < hw
            p = jnp.where(valid, p, 1.0)
            t = jnp.where(valid, t, 0.0)

        s_ref[...] += jnp.log(p + _EPS) * t          # VALU + EUP only, no XLU
        t_ref[...] += t

    return kernel


def _ce_class_partials(pred, target):
    """pred, target: (N, C, H, W) NCHW.  Returns lane-dense partial sums
    s_part, t_part of shape (N, C, TILE) such that
      S_c = sum(s_part[:, c, :])  and  T_c = sum(t_part[:, c, :])."""
    N, C, H, W = pred.shape
    HW = H * W
    pred3 = pred.reshape(N, C, HW)                   # free view of NCHW layout
    tgt3 = target.reshape(N, C, HW)

    tile = _pick_tile(C, HW)
    n_tiles = pl.cdiv(HW, tile)
    need_mask = (HW % tile) != 0
    kernel = _make_ce_sums_kernel(HW, tile, need_mask)

    in_spec = pl.BlockSpec((None, C, tile), lambda n, i: (n, 0, i))
    out_spec = pl.BlockSpec((None, C, tile), lambda n, i: (n, 0, 0))

    return pl.pallas_call(
        kernel,
        out_shape=(jax.ShapeDtypeStruct((N, C, tile), jnp.float32),
                   jax.ShapeDtypeStruct((N, C, tile), jnp.float32)),
        grid_spec=pltpu.PrefetchScalarGridSpec(
            num_scalar_prefetch=0,
            grid=(N, n_tiles),
            in_specs=[in_spec, in_spec],
            out_specs=(out_spec, out_spec),
        ),
        compiler_params=pltpu.CompilerParams(
            dimension_semantics=("parallel", "arbitrary")),
    )(pred3, tgt3)


@jax.jit
def _ce_loss(pred, target):
    N, C, H, W = pred.shape
    s_part, t_part = _ce_class_partials(pred, target)
    s_c = jnp.sum(s_part, axis=(0, 2))               # (C,) sum log(p+eps)*t
    t_c = jnp.sum(t_part, axis=(0, 2))               # (C,) sum t
    cw = 1.0 / (t_c + _EPS)
    cw = cw / jnp.sum(cw)
    return -(jnp.sum(cw * s_c) / (N * H * W))


class OhemCrossEntropy:
    """JAX/Pallas port of lib/utils/losses.py::OhemCrossEntropy (forward only)."""

    def __init__(self, ignore_label=-1, thres=0.7, min_kept=100000,
                 weight=None, hyp=None):
        self.thresh = thres
        self.min_kept = max(1, min_kept)
        self.ignore_label = ignore_label
        self.hyp = hyp
        # NOTE: exactly like the PyTorch _ce_forward head, ignore_label /
        # thres / min_kept are not used on the num_outputs == 1 path.

    def _ce_forward(self, pred, targets):
        # pred, targets: (N, C, H, W) NCHW, targets dense one-hot (as in the spec).
        return _ce_loss(pred, targets)

    def forward(self, pred, score, target):
        if self.hyp['model']['num_outputs'] == 1:
            pred = [pred]
        weights = self.hyp['train']['loss_balance_weights']
        assert len(weights) == len(pred)
        # TODO(synk): _ohem_forward (used when num_outputs > 1) requires a
        # global sort / top-k over masked per-pixel losses; no clean Pallas
        # equivalent, so only the single-output _ce_forward head is implemented.
        assert len(weights) == 1, "only the single-output (_ce_forward) path is supported"
        functions = [self._ce_forward]
        loss = sum(w * f(x, target) for w, x, f in zip(weights, pred, functions))
        return jnp.mean(loss)


if __name__ == "__main__":
    key = jax.random.PRNGKey(0)
    N, C, H, W = 2, 4, 16, 16
    k1, k2 = jax.random.split(key)

    logits = jax.random.normal(k1, (N, C, H, W), dtype=jnp.float32)
    pred = jax.nn.softmax(logits, axis=1)                          # probabilities, NCHW
    labels = jax.random.randint(k2, (N, H, W), 0, C)
    target = jax.nn.one_hot(labels, C, axis=1, dtype=jnp.float32)  # (N, C, H, W)

    hyp = {'model': {'num_outputs': 1},
           'train': {'loss_balance_weights': [1.0]}}
    module = OhemCrossEntropy(ignore_label=-1, thres=0.7, min_kept=100000, hyp=hyp)

    loss = module.forward(pred, None, target)
    loss = jax.block_until_ready(loss)

    # Pure-JAX reference of the PyTorch _ce_forward semantics.
    cw_ref = 1.0 / (jnp.sum(target, axis=(0, 2, 3)) + _EPS)
    cw_ref = cw_ref / jnp.sum(cw_ref)
    ref = -jnp.mean(jnp.sum(cw_ref[None, :, None, None]
                            * jnp.log(pred + _EPS) * target, axis=1))
    assert jnp.allclose(loss, ref, rtol=1e-5, atol=1e-6), (float(loss), float(ref))

    print("KERNEL_OK")
</pallas_src>

<mosaic_0001>
module attributes {stable_mosaic.version = 11 : i64} {
  func.func @kernel(%arg0: i32, %arg1: i32, %arg2: memref<1x4x256xf32, #tpu.memory_space<vmem>>, %arg3: memref<1x4x256xf32, #tpu.memory_space<vmem>>, %arg4: memref<1x4x256xf32, #tpu.memory_space<vmem>>, %arg5: memref<1x4x256xf32, #tpu.memory_space<vmem>>) attributes {dimension_semantics = [#tpu.dimension_semantics<parallel>, #tpu.dimension_semantics<arbitrary>], iteration_bounds = array<i64: 2, 1>, scalar_prefetch = 0 : i64, scratch_operands = 0 : i64, tpu.core_type = #tpu.core_type<tc>, window_params = [{transform_indices = @transform_0, window_bounds = array<i64: 1, 4, 256>}, {transform_indices = @transform_1, window_bounds = array<i64: 1, 4, 256>}, {transform_indices = @transform_2, window_bounds = array<i64: 1, 4, 256>}, {transform_indices = @transform_3, window_bounds = array<i64: 1, 4, 256>}]} {
    %c0_i32 = arith.constant 0 : i32
    %0 = arith.cmpi eq, %arg1, %c0_i32 : i32
    %1 = arith.extui %0 : i1 to i32
    %c0_i32_0 = arith.constant 0 : i32
    %2 = arith.cmpi ne, %1, %c0_i32_0 : i32
    scf.if %2 {
      %cst_18 = arith.constant 0.000000e+00 : f32
      %23 = vector.broadcast %cst_18 : f32 to vector<4x256xf32>
      %c0_19 = arith.constant 0 : index
      %c0_20 = arith.constant 0 : index
      %c0_21 = arith.constant 0 : index
      %24 = vector.load %arg4[%c0_19, %c0_20, %c0_21] : memref<1x4x256xf32, #tpu.memory_space<vmem>>, vector<1x4x256xf32>
      %25 = vector.shape_cast %24 : vector<1x4x256xf32> to vector<4x256xf32>
      %26 = vector.shape_cast %23 : vector<4x256xf32> to vector<1x4x256xf32>
      tpu.vector_store %arg4[%c0_19, %c0_20, %c0_21], %26 {strides = array<i32>} : memref<1x4x256xf32, #tpu.memory_space<vmem>>, vector<1x4x256xf32>,
      %cst_22 = arith.constant 0.000000e+00 : f32
      %27 = vector.broadcast %cst_22 : f32 to vector<4x256xf32>
      %c0_23 = arith.constant 0 : index
      %c0_24 = arith.constant 0 : index
      %c0_25 = arith.constant 0 : index
      %28 = vector.load %arg5[%c0_23, %c0_24, %c0_25] : memref<1x4x256xf32, #tpu.memory_space<vmem>>, vector<1x4x256xf32>
      %29 = vector.shape_cast %28 : vector<1x4x256xf32> to vector<4x256xf32>
      %30 = vector.shape_cast %27 : vector<4x256xf32> to vector<1x4x256xf32>
      tpu.vector_store %arg5[%c0_23, %c0_24, %c0_25], %30 {strides = array<i32>} : memref<1x4x256xf32, #tpu.memory_space<vmem>>, vector<1x4x256xf32>,
    } else {
    }
    %c0 = arith.constant 0 : index
    %c0_1 = arith.constant 0 : index
    %c0_2 = arith.constant 0 : index
    %3 = vector.load %arg2[%c0, %c0_1, %c0_2] : memref<1x4x256xf32, #tpu.memory_space<vmem>>, vector<1x4x256xf32>
    %4 = vector.shape_cast %3 : vector<1x4x256xf32> to vector<4x256xf32>
    %c0_3 = arith.constant 0 : index
    %c0_4 = arith.constant 0 : index
    %c0_5 = arith.constant 0 : index
    %5 = vector.load %arg3[%c0_3, %c0_4, %c0_5] : memref<1x4x256xf32, #tpu.memory_space<vmem>>, vector<1x4x256xf32>
    %6 = vector.shape_cast %5 : vector<1x4x256xf32> to vector<4x256xf32>
    %c0_6 = arith.constant 0 : index
    %c0_7 = arith.constant 0 : index
    %c0_8 = arith.constant 0 : index
    %7 = vector.load %arg4[%c0_6, %c0_7, %c0_8] : memref<1x4x256xf32, #tpu.memory_space<vmem>>, vector<1x4x256xf32>
    %8 = vector.shape_cast %7 : vector<1x4x256xf32> to vector<4x256xf32>
    %cst = arith.constant 1.000000e-07 : f32
    %9 = vector.broadcast %cst : f32 to vector<4x256xf32>
    %10 = arith.addf %4, %9 : vector<4x256xf32>
    %11 = math.log %10 : vector<4x256xf32>
    %12 = arith.mulf %11, %6 : vector<4x256xf32>
    %13 = arith.addf %8, %12 : vector<4x256xf32>
    %c0_9 = arith.constant 0 : index
    %c0_10 = arith.constant 0 : index
    %c0_11 = arith.constant 0 : index
    %14 = vector.load %arg4[%c0_9, %c0_10, %c0_11] : memref<1x4x256xf32, #tpu.memory_space<vmem>>, vector<1x4x256xf32>
    %15 = vector.shape_cast %14 : vector<1x4x256xf32> to vector<4x256xf32>
    %16 = vector.shape_cast %13 : vector<4x256xf32> to vector<1x4x256xf32>
    tpu.vector_store %arg4[%c0_9, %c0_10, %c0_11], %16 {strides = array<i32>} : memref<1x4x256xf32, #tpu.memory_space<vmem>>, vector<1x4x256xf32>,
    %c0_12 = arith.constant 0 : index
    %c0_13 = arith.constant 0 : index
    %c0_14 = arith.constant 0 : index
    %17 = vector.load %arg5[%c0_12, %c0_13, %c0_14] : memref<1x4x256xf32, #tpu.memory_space<vmem>>, vector<1x4x256xf32>
    %18 = vector.shape_cast %17 : vector<1x4x256xf32> to vector<4x256xf32>
    %19 = arith.addf %18, %6 : vector<4x256xf32>
    %c0_15 = arith.constant 0 : index
    %c0_16 = arith.constant 0 : index
    %c0_17 = arith.constant 0 : index
    %20 = vector.load %arg5[%c0_15, %c0_16, %c0_17] : memref<1x4x256xf32, #tpu.memory_space<vmem>>, vector<1x4x256xf32>
    %21 = vector.shape_cast %20 : vector<1x4x256xf32> to vector<4x256xf32>
    %22 = vector.shape_cast %19 : vector<4x256xf32> to vector<1x4x256xf32>
    tpu.vector_store %arg5[%c0_15, %c0_16, %c0_17], %22 {strides = array<i32>} : memref<1x4x256xf32, #tpu.memory_space<vmem>>, vector<1x4x256xf32>,
    return
  }
  func.func @transform_0(%arg0: i32, %arg1: i32) -> (i32, i32, i32) {
    %c0_i32 = arith.constant 0 : i32
    %c0_i32_0 = arith.constant 0 : i32
    return %arg0, %c0_i32, %arg1 : i32, i32, i32
  }
  func.func @transform_1(%arg0: i32, %arg1: i32) -> (i32, i32, i32) {
    %c0_i32 = arith.constant 0 : i32
    %c0_i32_0 = arith.constant 0 : i32
    return %arg0, %c0_i32, %arg1 : i32, i32, i32
  }
  func.func @transform_2(%arg0: i32, %arg1: i32) -> (i32, i32, i32) {
    %c0_i32 = arith.constant 0 : i32
    %c0_i32_0 = arith.constant 0 : i32
    %c0_i32_1 = arith.constant 0 : i32
    return %arg0, %c0_i32, %c0_i32_0 : i32, i32, i32
  }
  func.func @transform_3(%arg0: i32, %arg1: i32) -> (i32, i32, i32) {
    %c0_i32 = arith.constant 0 : i32
    %c0_i32_0 = arith.constant 0 : i32
    %c0_i32_1 = arith.constant 0 : i32
    return %arg0, %c0_i32, %c0_i32_0 : i32, i32, i32
  }
}

</mosaic_0001>

<llo_original>
// kernel: _ce_loss.1
$region0: #{_ce_loss.1}
  #allocation0 [shape = 'u32[]', space=smem, size = 0x4, offset = 0x4, fixed_abs, tag = 'smem constant byte address 0x4 - core index']
  #allocation1 [shape = 'u32[144,128]{1,0:T(1,128)}', space=vmem, size = 0x12000, scoped, tag = 'internal scratch']
  %s0 = inlined_call_operand.vmem [shape: f32[2,4,256], index: 0, kind: input, shape index: {}]
  %s1 = inlined_call_operand.vmem [shape: f32[2,4,256], index: 1, kind: input, shape index: {}]
  %s2 = inlined_call_operand.vmem [shape: f32[2,4,256], index: 2, kind: output, shape index: {0}]
  %s3 = inlined_call_operand.vmem [shape: f32[2,4,256], index: 3, kind: output, shape index: {1}]
  %4 = xla_tuple %s2, %s3
  %s5 = sld [smem:[#allocation0]]
  $region53: #{_ce_loss.1} parent=0
    _
  %s7 = ssub.s32 1, %s5
  %s8 = scalar_select 0, %s7, %s5
  loop: start=0, step=1, limit=4
  $region2: #{_ce_loss.1} parent=0 // loop_pre_header
    _
  $region3: #{_ce_loss.1} parent=0 // loop_header
    %s10 = sphi 0, %s14
    %p11 = scmp.ge.s32.totalorder %s10, 4
    %s17 = sphi 0, %s29
    %s18 = sphi 0, %s25
    %s19 = sphi 0, %s17
    %s20 = sphi 0, %s18
    %s21 = sphi 0, %s19
    %s22 = sphi 0, %s20
    %s34 = sphi 0, %s36
    %s37 = sphi 0, %s34
    %s38 = sphi 0, %s37
    %s54 = sphi 0, %s38
    %s62 = sphi 0, %s64
    %s65 = sphi 0, %s62
    %s66 = sphi 0, %s65
    %s82 = sphi 0, %s66
    %s88 = sphi 0, %s90
    %s91 = sphi 0, %s88
    %s92 = sphi 0, %s91
    %s108 = sphi 0, %s92
    %s114 = sphi 0, %s116
    %s117 = sphi 0, %s114
    %s118 = sphi 0, %s117
    %s134 = sphi 0, %s118
  $region4: #{_ce_loss.1} parent=0 // loop_header_branch
    %13 = sbr.rel (%p11) target = $region8
  $region5: #{_ce_loss.1} parent=0 // loop_body
    %s15 = ssub.s32 %s10, 1
    %s16 = ssub.s32 %s10, 2
    %s23 = sadd.s32 1, %s18
    %p24 = scmp.ge.s32.totalorder %s23, 1
    %s25 = scalar_select %p24, 0, %s23
    %s26 = sadd.s32 1, %s17
    %s27 = scalar_select %p24, %s26, %s17
    %p28 = scmp.ge.s32.totalorder %s27, 2
    %s29 = scalar_select %p28, 0, %s27
    %s30 = ssub.s32 %s17, %s29
    %s31 = ssub.s32 %s18, %s25
    %s32 = sor.u32 %s30, %s31
    %p33 = scmp.eq.s32.totalorder %s32, 0
    %s35 = sadd.s32 %s34, 1
    %s36 = scalar_select %p33, %s34, %s35
    %p39 = pneg %p33
    %p40 = scmp.eq.s32.totalorder %s10, 1
    %p41 = por %p39, %p40
    %p42 = scmp.ne.s32.totalorder %s34, %s37
    %p43 = scmp.eq.s32.totalorder %s10, 0
    %p44 = por %p42, %p43
    %p45 = scmp.ne.s32.totalorder %s34, %s37
    %p46 = scmp.eq.s32.totalorder %s15, 1
    %p47 = por %p45, %p46
    %p48 = scmp.ne.s32.totalorder %s37, %s38
    %p49 = scmp.eq.s32.totalorder %s15, 0
    %p50 = por %p48, %p49
    %p51 = scmp.ne.s32.totalorder %s37, %s38
    %p52 = scmp.eq.s32.totalorder %s16, 1
    %p53 = por %p51, %p52
    %p55 = scmp.ne.s32.totalorder %s38, %s54
    %p56 = scmp.eq.s32.totalorder %s16, 0
    %p57 = por %p55, %p56
    %s58 = ssub.s32 %s17, %s29
    %s59 = ssub.s32 %s18, %s25
    %s60 = sor.u32 %s58, %s59
    %p61 = scmp.eq.s32.totalorder %s60, 0
    %s63 = sadd.s32 %s62, 1
    %s64 = scalar_select %p61, %s62, %s63
    %p67 = pneg %p61
    %p68 = scmp.eq.s32.totalorder %s10, 1
    %p69 = por %p67, %p68
    %p70 = scmp.ne.s32.totalorder %s62, %s65
    %p71 = scmp.eq.s32.totalorder %s10, 0
    %p72 = por %p70, %p71
    %p73 = scmp.ne.s32.totalorder %s62, %s65
    %p74 = scmp.eq.s32.totalorder %s15, 1
    %p75 = por %p73, %p74
    %p76 = scmp.ne.s32.totalorder %s65, %s66
    %p77 = scmp.eq.s32.totalorder %s15, 0
    %p78 = por %p76, %p77
    %p79 = scmp.ne.s32.totalorder %s65, %s66
    %p80 = scmp.eq.s32.totalorder %s16, 1
    %p81 = por %p79, %p80
    %p83 = scmp.ne.s32.totalorder %s66, %s82
    %p84 = scmp.eq.s32.totalorder %s16, 0
    %p85 = por %p83, %p84
    %s86 = ssub.s32 %s17, %s29
    %p87 = scmp.eq.s32.totalorder %s86, 0
    %s89 = sadd.s32 %s88, 1
    %s90 = scalar_select %p87, %s88, %s89
    %p93 = pneg %p87
    %p94 = scmp.eq.s32.totalorder %s10, 1
    %p95 = por %p93, %p94
    %p96 = scmp.ne.s32.totalorder %s88, %s91
    %p97 = scmp.eq.s32.totalorder %s10, 0
    %p98 = por %p96, %p97
    %p99 = scmp.ne.s32.totalorder %s88, %s91
    %p100 = scmp.eq.s32.totalorder %s15, 1
    %p101 = por %p99, %p100
    %p102 = scmp.ne.s32.totalorder %s91, %s92
    %p103 = scmp.eq.s32.totalorder %s15, 0
    %p104 = por %p102, %p103
    %p105 = scmp.ne.s32.totalorder %s91, %s92
    %p106 = scmp.eq.s32.totalorder %s16, 1
    %p107 = por %p105, %p106
    %p109 = scmp.ne.s32.totalorder %s92, %s108
    %p110 = scmp.eq.s32.totalorder %s16, 0
    %p111 = por %p109, %p110
    %s112 = ssub.s32 %s17, %s29
    %p113 = scmp.eq.s32.totalorder %s112, 0
    %s115 = sadd.s32 %s114, 1
    %s116 = scalar_select %p113, %s114, %s115
    %p119 = pneg %p113
    %p120 = scmp.eq.s32.totalorder %s10, 1
    %p121 = por %p119, %p120
    %p122 = scmp.ne.s32.totalorder %s114, %s117
    %p123 = scmp.eq.s32.totalorder %s10, 0
    %p124 = por %p122, %p123
    %p125 = scmp.ne.s32.totalorder %s114, %s117
    %p126 = scmp.eq.s32.totalorder %s15, 1
    %p127 = por %p125, %p126
    %p128 = scmp.ne.s32.totalorder %s117, %s118
    %p129 = scmp.eq.s32.totalorder %s15, 0
    %p130 = por %p128, %p129
    %p131 = scmp.ne.s32.totalorder %s117, %s118
    %p132 = scmp.eq.s32.totalorder %s16, 1
    %p133 = por %p131, %p132
    %p135 = scmp.ne.s32.totalorder %s118, %s134
    %p136 = scmp.eq.s32.totalorder %s16, 0
    %p137 = por %p135, %p136
    %p138 = scmp.le.s32.totalorder 1, %s10
    %p139 = scmp.lt.s32.totalorder %s10, 3
    %p140 = pnand %p138, %p139
    %p141 = pneg %p140
    // Predicated region
    $region9: #{_ce_loss.1} parent=5 // pred_check
      _
    $region10: #{_ce_loss.1} parent=5 // pred_check_branch
      %143 = sbr.rel (%p140) target = $region12
    $region11: #{_ce_loss.1} parent=5 // pred_region
      %s144 = ssub.s32 %s10, 1
    $region12: #{_ce_loss.1} parent=5 // pred_fallthru
      _
    %p145 = scmp.lt.s32.totalorder %s10, 2
    // Predicated region
    $region13: #{_ce_loss.1} parent=5 // pred_check
      %p146 = pneg %p145
    $region14: #{_ce_loss.1} parent=5 // pred_check_branch
      %148 = sbr.rel (%p146) target = $region16
    $region15: #{_ce_loss.1} parent=5 // pred_region
      // Predicated region
      $region17: #{_ce_loss.1} parent=15 // pred_check
        %p149 = pneg %p44
      $region18: #{_ce_loss.1} parent=15 // pred_check_branch
        %151 = sbr.rel (%p149) target = $region20
      $region19: #{_ce_loss.1} parent=15 // pred_region
        %s152 = smul.u32 2, %s18
        %p153 = scmp.lt.s32.totalorder %s17, 1
        %s154 = scalar_select %p153, %s17, 1
        %p155 = scmp.lt.s32.totalorder %s152, 1
        %s156 = scalar_select %p155, %s152, 1
        %s157 = smul.addr %s154, 2
        %s158 = sadd.s32 %s156, %s157
        %s159 = smul.addr %s158, 4
        %s160 = scalar_lea.vmem %s0, %s159
        %s161 = smul.u32 2, %s18
      $region20: #{_ce_loss.1} parent=15 // pred_fallthru
        _
      // Predicated region
      $region21: #{_ce_loss.1} parent=15 // pred_check
        %p162 = pneg %p72
      $region22: #{_ce_loss.1} parent=15 // pred_check_branch
        %164 = sbr.rel (%p162) target = $region24
      $region23: #{_ce_loss.1} parent=15 // pred_region
        %s165 = smul.u32 2, %s18
        %p166 = scmp.lt.s32.totalorder %s17, 1
        %s167 = scalar_select %p166, %s17, 1
        %p168 = scmp.lt.s32.totalorder %s165, 1
        %s169 = scalar_select %p168, %s165, 1
        %s170 = smul.addr %s167, 2
        %s171 = sadd.s32 %s169, %s170
        %s172 = smul.addr %s171, 4
        %s173 = scalar_lea.vmem %s1, %s172
        %s174 = smul.u32 2, %s18
      $region24: #{_ce_loss.1} parent=15 // pred_fallthru
        _
    $region16: #{_ce_loss.1} parent=5 // pred_fallthru
      _
    %p175 = scmp.le.s32.totalorder 1, %s10
    %p176 = scmp.lt.s32.totalorder %s10, 3
    %p177 = pnand %p175, %p176
    %p178 = pneg %p177
    // Predicated region
    $region25: #{_ce_loss.1} parent=5 // pred_check
      _
    $region26: #{_ce_loss.1} parent=5 // pred_check_branch
      %180 = sbr.rel (%p177) target = $region28
    $region27: #{_ce_loss.1} parent=5 // pred_region
      %s181 = ssub.s32 %s10, 1
      %s182 = smul.u32 2, %s20
      %p183 = scmp.lt.s32.totalorder %s19, 1
      %s184 = scalar_select %p183, %s19, 1
      %p185 = scmp.lt.s32.totalorder %s182, 1
      %s186 = scalar_select %p185, %s182, 1
      %s187 = smul.addr %s184, 2
      %s188 = sadd.s32 %s186, %s187
      %s189 = smul.addr %s188, 4
      %s190 = scalar_lea.vmem %s0, %s189
      %p191 = pneg %p50
      %p192 = pneg %p47
      %s193 = smul.u32 2, %s20
      %p194 = scmp.lt.s32.totalorder %s19, 1
      %s195 = scalar_select %p194, %s19, 1
      %p196 = scmp.lt.s32.totalorder %s193, 1
      %s197 = scalar_select %p196, %s193, 1
      %s198 = smul.addr %s195, 2
      %s199 = sadd.s32 %s197, %s198
      %s200 = smul.addr %s199, 4
      %s201 = scalar_lea.vmem %s1, %s200
      %p202 = pneg %p78
      %p203 = pneg %p75
      %p204 = pneg %p104
      %p205 = pneg %p101
      %p206 = scmp.lt.s32.totalorder %s19, 1
      %s207 = scalar_select %p206, %s19, 1
      %s208 = smul.addr %s207, 2
      %s209 = smul.addr %s208, 4
      %s210 = scalar_lea.vmem %s2, %s209
      %p211 = pneg %p130
      %p212 = pneg %p127
      %p213 = scmp.lt.s32.totalorder %s19, 1
      %s214 = scalar_select %p213, %s19, 1
      %s215 = smul.addr %s214, 2
      %s216 = smul.addr %s215, 4
      %s217 = scalar_lea.vmem %s3, %s216
      %s218 = smul.u32 2, %s20
      %p219 = scmp.lt.s32.totalorder %s19, 1
      %s220 = scalar_select %p219, %s19, 1
      %p221 = scmp.lt.s32.totalorder %s218, 1
      %s222 = scalar_select %p221, %s218, 1
      %s223 = smul.addr %s220, 2
      %s224 = sadd.s32 %s222, %s223
      %s225 = smul.addr %s224, 4
      %s226 = scalar_lea.vmem %s0, %s225
      %s227 = smul.u32 2, %s20
      %s228 = smul.u32 2, %s20
      %p229 = scmp.lt.s32.totalorder %s19, 1
      %s230 = scalar_select %p229, %s19, 1
      %p231 = scmp.lt.s32.totalorder %s228, 1
      %s232 = scalar_select %p231, %s228, 1
      %s233 = smul.addr %s230, 2
      %s234 = sadd.s32 %s232, %s233
      %s235 = smul.addr %s234, 4
      %s236 = scalar_lea.vmem %s1, %s235
      %s237 = smul.u32 2, %s20
      %p238 = scmp.lt.s32.totalorder %s19, 1
      %s239 = scalar_select %p238, %s19, 1
      %s240 = smul.addr %s239, 2
      %s241 = smul.addr %s240, 4
      %s242 = scalar_lea.vmem %s2, %s241
      %p243 = scmp.lt.s32.totalorder %s19, 1
      %s244 = scalar_select %p243, %s19, 1
      %s245 = smul.addr %s244, 2
      %s246 = smul.addr %s245, 4
      %s247 = scalar_lea.vmem %s3, %s246
      %p248 = scmp.eq.s32.totalorder %s20, 0
      // Predicated region
      $region29: #{_ce_loss.1} parent=27 // pred_check
        %p249 = pneg %p248
      $region30: #{_ce_loss.1} parent=27 // pred_check_branch
        %251 = sbr.rel (%p249) target = $region32
      $region31: #{_ce_loss.1} parent=27 // pred_region
        %252 = vst [vmem:[%s242] sm:$0xff] 0.0
        %253 = vst [vmem:[%s247] sm:$0xff] 0.0
      $region32: #{_ce_loss.1} parent=27 // pred_fallthru
        _
      %v254 = vld [vmem:[%s226] sm:$0xff]
      %v255 = vld [vmem:[%s236] sm:$0xff]
      %v256 = vld [vmem:[%s242] sm:$0xff]
      %v257 = vadd.f32 %v254, 1e-07
      %v258 = vlog2.pop %v257
      %v259 = vmul.f32 %v258, 0.6931472
      %v260 = vmul.f32 %v259, %v255
      %v261 = vadd.f32 %v256, %v260
      %262 = vst [vmem:[%s242] sm:$0xff] %v261
      %v263 = vld [vmem:[%s247] sm:$0xff]
      %v264 = vadd.f32 %v263, %v255
      %265 = vst [vmem:[%s247] sm:$0xff] %v264
      %p266 = scmp.lt.s32.totalorder %s19, 1
      %s267 = scalar_select %p266, %s19, 1
      %s268 = smul.addr %s267, 2
      %s269 = smul.addr %s268, 4
      %s270 = scalar_lea.vmem %s2, %s269
      %p271 = scmp.lt.s32.totalorder %s19, 1
      %s272 = scalar_select %p271, %s19, 1
      %s273 = smul.addr %s272, 2
      %s274 = smul.addr %s273, 4
      %s275 = scalar_lea.vmem %s3, %s274
      // Predicated region
      $region33: #{_ce_loss.1} parent=27 // pred_check
        %p276 = pneg %p101
      $region34: #{_ce_loss.1} parent=27 // pred_check_branch
        %278 = sbr.rel (%p276) target = $region36
      $region35: #{_ce_loss.1} parent=27 // pred_region
        _
      $region36: #{_ce_loss.1} parent=27 // pred_fallthru
        _
      // Predicated region
      $region37: #{_ce_loss.1} parent=27 // pred_check
        %p279 = pneg %p127
      $region38: #{_ce_loss.1} parent=27 // pred_check_branch
        %281 = sbr.rel (%p279) target = $region40
      $region39: #{_ce_loss.1} parent=27 // pred_region
        _
      $region40: #{_ce_loss.1} parent=27 // pred_fallthru
        _
    $region28: #{_ce_loss.1} parent=5 // pred_fallthru
      _
    %p282 = scmp.le.s32.totalorder 2, %s10
    // Predicated region
    $region41: #{_ce_loss.1} parent=5 // pred_check
      %p283 = pneg %p282
    $region42: #{_ce_loss.1} parent=5 // pred_check_branch
      %285 = sbr.rel (%p283) target = $region44
    $region43: #{_ce_loss.1} parent=5 // pred_region
      %s286 = ssub.s32 %s10, 2
      // Predicated region
      $region45: #{_ce_loss.1} parent=43 // pred_check
        %p287 = pneg %p107
      $region46: #{_ce_loss.1} parent=43 // pred_check_branch
        %289 = sbr.rel (%p287) target = $region48
      $region47: #{_ce_loss.1} parent=43 // pred_region
        %p290 = scmp.lt.s32.totalorder %s21, 1
        %s291 = scalar_select %p290, %s21, 1
        %s292 = smul.addr %s291, 2
        %s293 = smul.addr %s292, 4
        %s294 = scalar_lea.vmem %s2, %s293
      $region48: #{_ce_loss.1} parent=43 // pred_fallthru
        _
      // Predicated region
      $region49: #{_ce_loss.1} parent=43 // pred_check
        %p295 = pneg %p133
      $region50: #{_ce_loss.1} parent=43 // pred_check_branch
        %297 = sbr.rel (%p295) target = $region52
      $region51: #{_ce_loss.1} parent=43 // pred_region
        %p298 = scmp.lt.s32.totalorder %s21, 1
        %s299 = scalar_select %p298, %s21, 1
        %s300 = smul.addr %s299, 2
        %s301 = smul.addr %s300, 4
        %s302 = scalar_lea.vmem %s3, %s301
      $region52: #{_ce_loss.1} parent=43 // pred_fallthru
        _
    $region44: #{_ce_loss.1} parent=5 // pred_fallthru
      _
  $region6: #{_ce_loss.1} parent=0 // loop_footer
    %s14 = sadd.s32 1, %s10
  $region7: #{_ce_loss.1} parent=0 // loop_footer_branch
    %9 = sbr.rel target = $region3
  $region8: #{_ce_loss.1} parent=0 // loop_exit
    _

</llo_original>
